<compile_context>
chip_gen: v6e
topology: v6e:2x2x1
jax: 0.10.0
libtpu: 0.0.40
codegen_flags: <defaults>
</compile_context>

<pallas_src>
import functools
import math

import jax
import jax.numpy as jnp
from jax import lax
from jax.experimental import pallas as pl
from jax.experimental.pallas import tpu as pltpu

EPS = 1e-5
_LANES = 128
_VAR_FLOOR = float(jnp.finfo(jnp.float32).tiny)


def _cdiv(a, b):
    return -(-a // b)


def _round_up(a, m):
    return ((a + m - 1) // m) * m


def _round_down(a, m):
    return (a // m) * m


def _tpu_generation_params():
    """num_cores / per-block byte target / scoped-VMEM ceiling by TPU generation."""
    try:
        kind = jax.devices()[0].device_kind.lower()
    except Exception:  # pragma: no cover - defensive; assume a generic TPU
        kind = ""
    is_v7 = ("v7" in kind) or ("7x" in kind)
    if is_v7:
        # 2 TensorCores, 64 MiB physical VMEM, ~3.2 TB/s HBM -> bigger blocks.
        return dict(num_cores=2, block_bytes=8 << 20, vmem_cap=48 << 20)
    if ("v4" in kind) or ("v5p" in kind):
        # Megacore generations: 2 TCs, 128 MiB VMEM.
        return dict(num_cores=2, block_bytes=4 << 20, vmem_cap=96 << 20)
    # v5e / v6e: single TensorCore, 128 MiB physical VMEM.
    return dict(num_cores=1, block_bytes=4 << 20, vmem_cap=96 << 20)


def _popart_kernel(mean_ref, scale_ref, x_ref, o_ref, *, unnorm):
    # mean_ref, scale_ref: VMEM (1, col_tile) f32, resident across the inner
    #                      (row) grid axis (constant block index).
    # x_ref, o_ref       : VMEM (tile_rows, col_tile).
    x = x_ref[...]
    if unnorm:
        out = mean_ref[...] + scale_ref[...] * x
    else:
        out = (x - mean_ref[...]) * scale_ref[...]
    o_ref[...] = out.astype(o_ref.dtype)


def _popart_call(xw, mean_w, scale_w, *, unnorm, num_cores, block_bytes, vmem_cap):
    """One pallas_call over a 2-D [rows, width] view with matching (1, width) stats."""
    rows, width = xw.shape
    itemsize = jnp.dtype(xw.dtype).itemsize
    # packed-sublane multiple of the second-to-last dim (f32:8, bf16:16, i8:32)
    sublane = max(8, 32 // itemsize)
    max_block_elems = max(1, block_bytes // itemsize)

    # ---- column tiling: only kicks in when even a sublane-high full-width
    #      block overflows the per-block budget (very large dim). ----
    if width % _LANES == 0 and width > max_block_elems // sublane:
        col_tile = max(_LANES, _round_down(max_block_elems // sublane, _LANES))
    else:
        col_tile = width  # full width (contiguous HBM rows); block dim == array dim is legal
    n_col = _cdiv(width, col_tile)

    # ---- row tiling: biggest block within the budget.  On multi-TC chips cap
    #      at ceil(rows / num_cores) so the row axis still splits across cores;
    #      on single-TC chips no artificial split (per-step overhead only). ----
    rows_budget = max(sublane, _round_down(max_block_elems // col_tile, sublane))
    if num_cores > 1:
        per_core = _round_up(max(1, _cdiv(rows, num_cores)), sublane)
        rows_budget = min(rows_budget, per_core)
    tile_rows = max(sublane, min(rows_budget, _round_up(rows, sublane)))
    n_row = _cdiv(rows, tile_rows)

    # ---- scoped-VMEM limit from the ACTUAL block sizes:
    #      2x(in) + 2x(out) double buffers + 2x(mean + scale) + headroom. ----
    x_block_bytes = tile_rows * col_tile * itemsize
    stat_block_bytes = 2 * col_tile * 4  # mean + scale, f32
    needed = 2 * 2 * x_block_bytes + 2 * stat_block_bytes + (2 << 20)
    vmem_limit = int(min(vmem_cap, max(needed, 32 << 20)))

    kernel = functools.partial(_popart_kernel, unnorm=unnorm)

    return pl.pallas_call(
        kernel,
        out_shape=jax.ShapeDtypeStruct((rows, width), xw.dtype),
        grid_spec=pl.GridSpec(
            # Column axis outermost so mean/scale block indices are constant
            # across the inner row sweep -> fetched once per column stripe.
            grid=(n_col, n_row),
            in_specs=[
                pl.BlockSpec((1, col_tile), lambda j, i: (0, j)),          # mean
                pl.BlockSpec((1, col_tile), lambda j, i: (0, j)),          # scale
                pl.BlockSpec((tile_rows, col_tile), lambda j, i: (i, j)),  # x
            ],
            out_specs=pl.BlockSpec((tile_rows, col_tile), lambda j, i: (i, j)),
        ),
        compiler_params=pltpu.CompilerParams(
            dimension_semantics=("parallel", "parallel"),
            vmem_limit_bytes=vmem_limit,
        ),
    )(mean_w, scale_w, xw)


def diagonal_popart_forward(x, m, v, debias, *, unnorm=False):
    """Pallas implementation of DiagonalPopArt.forward.

    x      : [..., dim]
    m, v   : [dim] running statistics
    debias : [1]
    """
    orig_shape = x.shape
    dim = orig_shape[-1]
    x2 = x.reshape(-1, dim)
    n = x2.shape[0]
    if n == 0:
        return x

    # ---- per-feature statistics, hoisted out of the kernel (done once).
    #      f32 (no f64 vector path on TPU); clamp var so catastrophic
    #      cancellation can't produce NaN/Inf where the f64 torch path would not.
    d = jnp.maximum(debias.reshape(()).astype(jnp.float32), EPS)
    mf = m.reshape(dim).astype(jnp.float32)
    vf = v.reshape(dim).astype(jnp.float32)
    mean = mf / d
    var = jnp.maximum((vf - mf * mf) / d, _VAR_FLOOR)  # matches torch: (v - m^2)/debias
    scale = jnp.sqrt(var) if unnorm else lax.rsqrt(var)

    params = _tpu_generation_params()

    def run(x2d, k):
        rows = x2d.shape[0] // k
        width = k * dim
        xw = x2d.reshape(rows, width)
        if k > 1:
            mean_w = jnp.tile(mean, (k,)).reshape(1, width)
            scale_w = jnp.tile(scale, (k,)).reshape(1, width)
        else:
            mean_w = mean.reshape(1, width)
            scale_w = scale.reshape(1, width)
        return _popart_call(xw, mean_w, scale_w, unnorm=unnorm, **params)

    # ---- lane-dense layout: fold k rows into the lane axis so the last dim is
    #      a multiple of 128 (full-width vector stores instead of vst.msk). ----
    if dim % _LANES == 0:
        return run(x2, 1).reshape(orig_shape)

    k_fold = _LANES // math.gcd(dim, _LANES)
    if n % k_fold == 0:
        return run(x2, k_fold).reshape(orig_shape)

    n_main = _round_down(n, k_fold)
    if n_main == 0:
        # Fewer rows than one fold group: tiny input, narrow path is fine.
        return run(x2, 1).reshape(orig_shape)

    # Ragged row count: lane-dense kernel over the largest divisible prefix,
    # tiny (< k_fold <= 128 rows) remainder handled by a second small call.
    out_main = run(x2[:n_main], k_fold).reshape(n_main, dim)
    out_rem = run(x2[n_main:], 1)
    return jnp.concatenate([out_main, out_rem], axis=0).reshape(orig_shape)


def _reference_forward(x, m, v, debias, unnorm=False):
    d = jnp.maximum(debias.astype(jnp.float32).reshape(()), EPS)
    mf = m.astype(jnp.float32)
    vf = v.astype(jnp.float32)
    mean = mf / d
    var = jnp.maximum((vf - jnp.square(mf)) / d, _VAR_FLOOR)
    xf = x.astype(jnp.float32)
    if unnorm:
        return (mean + jnp.sqrt(var) * xf).astype(x.dtype)
    return ((xf - mean) * lax.rsqrt(var)).astype(x.dtype)


if __name__ == "__main__":
    key = jax.random.PRNGKey(0)
    k_x, k_m, k_v, k_x2 = jax.random.split(key, 4)

    batch, seq, dim = 2, 8, 32
    x = jax.random.normal(k_x, (batch, seq, dim), dtype=jnp.float32)

    # Deterministic "running statistics" buffers with v - m^2 > 0.
    m = 0.1 * jax.random.normal(k_m, (dim,), dtype=jnp.float32)
    v = jnp.square(m) + 0.5 + jax.nn.softplus(
        jax.random.normal(k_v, (dim,), dtype=jnp.float32))
    debias = jnp.array([0.7], dtype=jnp.float32)

    # TODO(synk): update() mutates weight/bias/m/v/debias in-place (stateful);
    # only forward() is implemented as a kernel here (weight/bias unused by it).

    # Case 1: foldable row count (16 % 4 == 0) -> single lane-dense call.
    out_norm = jax.block_until_ready(
        diagonal_popart_forward(x, m, v, debias, unnorm=False))
    out_unnorm = jax.block_until_ready(
        diagonal_popart_forward(x, m, v, debias, unnorm=True))
    ref_norm = _reference_forward(x, m, v, debias, unnorm=False)
    ref_unnorm = _reference_forward(x, m, v, debias, unnorm=True)
    assert out_norm.shape == x.shape and out_norm.dtype == x.dtype
    assert jnp.allclose(out_norm, ref_norm, atol=1e-5, rtol=1e-5)
    assert jnp.allclose(out_unnorm, ref_unnorm, atol=1e-5, rtol=1e-5)

    # Case 2: non-foldable row count (15 rows, fold factor 4) ->
    # lane-dense prefix (12 rows) + tiny remainder call (3 rows).
    x_odd = jax.random.normal(k_x2, (3, 5, dim), dtype=jnp.float32)
    out_odd = jax.block_until_ready(
        diagonal_popart_forward(x_odd, m, v, debias, unnorm=False))
    ref_odd = _reference_forward(x_odd, m, v, debias, unnorm=False)
    assert out_odd.shape == x_odd.shape
    assert jnp.allclose(out_odd, ref_odd, atol=1e-5, rtol=1e-5)

    # Case 3: dim already a multiple of 128 -> no fold, single dense call.
    dim_w = 256
    x_wide = jax.random.normal(k_x, (4, dim_w), dtype=jnp.float32)
    m_w = 0.05 * jax.random.normal(k_m, (dim_w,), dtype=jnp.float32)
    v_w = jnp.square(m_w) + 0.5
    out_wide = jax.block_until_ready(
        diagonal_popart_forward(x_wide, m_w, v_w, debias, unnorm=True))
    ref_wide = _reference_forward(x_wide, m_w, v_w, debias, unnorm=True)
    assert jnp.allclose(out_wide, ref_wide, atol=1e-5, rtol=1e-5)

    print("KERNEL_OK")
</pallas_src>

<mosaic_0001>
module attributes {stable_mosaic.version = 11 : i64} {
  func.func @_popart_kernel(%arg0: i32, %arg1: i32, %arg2: memref<1x128xf32, #tpu.memory_space<vmem>>, %arg3: memref<1x128xf32, #tpu.memory_space<vmem>>, %arg4: memref<8x128xf32, #tpu.memory_space<vmem>>, %arg5: memref<8x128xf32, #tpu.memory_space<vmem>>) attributes {dimension_semantics = [#tpu.dimension_semantics<parallel>, #tpu.dimension_semantics<parallel>], iteration_bounds = array<i64: 1, 1>, scalar_prefetch = 0 : i64, scratch_operands = 0 : i64, tpu.core_type = #tpu.core_type<tc>, window_params = [{transform_indices = @transform_0, window_bounds = array<i64: 1, 128>}, {transform_indices = @transform_1, window_bounds = array<i64: 1, 128>}, {transform_indices = @transform_2, window_bounds = array<i64: 8, 128>}, {transform_indices = @transform_3, window_bounds = array<i64: 8, 128>}]} {
    %c0 = arith.constant 0 : index
    %c0_0 = arith.constant 0 : index
    %0 = vector.load %arg4[%c0, %c0_0] : memref<8x128xf32, #tpu.memory_space<vmem>>, vector<8x128xf32>
    %c0_1 = arith.constant 0 : index
    %c0_2 = arith.constant 0 : index
    %1 = vector.load %arg2[%c0_1, %c0_2] : memref<1x128xf32, #tpu.memory_space<vmem>>, vector<1x128xf32>
    %2 = vector.broadcast %1 : vector<1x128xf32> to vector<8x128xf32>
    %3 = arith.subf %0, %2 : vector<8x128xf32>
    %c0_3 = arith.constant 0 : index
    %c0_4 = arith.constant 0 : index
    %4 = vector.load %arg3[%c0_3, %c0_4] : memref<1x128xf32, #tpu.memory_space<vmem>>, vector<1x128xf32>
    %5 = vector.broadcast %4 : vector<1x128xf32> to vector<8x128xf32>
    %6 = arith.mulf %3, %5 : vector<8x128xf32>
    %c0_5 = arith.constant 0 : index
    %c0_6 = arith.constant 0 : index
    %7 = vector.load %arg5[%c0_5, %c0_6] : memref<8x128xf32, #tpu.memory_space<vmem>>, vector<8x128xf32>
    tpu.vector_store %arg5[%c0_5, %c0_6], %6 {strides = array<i32>} : memref<8x128xf32, #tpu.memory_space<vmem>>, vector<8x128xf32>,
    return
  }
  func.func @transform_0(%arg0: i32, %arg1: i32) -> (i32, i32) {
    %c0_i32 = arith.constant 0 : i32
    %c0_i32_0 = arith.constant 0 : i32
    return %c0_i32, %arg0 : i32, i32
  }
  func.func @transform_1(%arg0: i32, %arg1: i32) -> (i32, i32) {
    %c0_i32 = arith.constant 0 : i32
    %c0_i32_0 = arith.constant 0 : i32
    return %c0_i32, %arg0 : i32, i32
  }
  func.func @transform_2(%arg0: i32, %arg1: i32) -> (i32, i32) {
    %c0_i32 = arith.constant 0 : i32
    return %arg1, %arg0 : i32, i32
  }
  func.func @transform_3(%arg0: i32, %arg1: i32) -> (i32, i32) {
    %c0_i32 = arith.constant 0 : i32
    return %arg1, %arg0 : i32, i32
  }
}

</mosaic_0001>

<llo_original>
// kernel: tpu_custom_call.1
$region0: #{tpu_custom_call.1}
  #allocation0 [shape = 'u32[]', space=smem, size = 0x4, offset = 0x4, fixed_abs, tag = 'smem constant byte address 0x4 - core index']
  #allocation1 [shape = 'u32[144,128]{1,0:T(1,128)}', space=vmem, size = 0x12000, scoped, tag = 'internal scratch']
  %s0 = inlined_call_operand.hbm [shape: f32[1,128], index: 0, kind: input, shape index: {}]
  %s1 = inlined_call_operand.vmem [shape: f32[1,128], index: 1, kind: input, shape index: {}]
  %s2 = inlined_call_operand.hbm [shape: f32[4,128], index: 2, kind: input, shape index: {}]
  %s3 = inlined_call_operand.hbm [shape: f32[4,128], index: 3, kind: output, shape index: {}]
  %s4 = sld [smem:[#allocation0]]
  $region30: #{tpu_custom_call.1} parent=0
    _
  %s6 = ssub.s32 1, %s4
  %s7 = scalar_select 0, %s6, %s4
  $region1: #{tpu_custom_call.1} parent=0
    #allocation2 [shape = 'u8[512]{0}', space=vmem, size = 0x400, scoped, tag = 'input window, operand 0, single buffered']
    #allocation3 [shape = 's32[1]{0}', space=sflag, size = 0x4, scoped, tag = 'scoped memory for tpu_custom_call.1']
    #allocation4 [shape = 's32[1]{0}', space=sflag, size = 0x4, scoped, tag = 'scoped memory for tpu_custom_call.1']
    #allocation5 [shape = 'u8[4096]{0}', space=vmem, size = 0x1000, scoped, tag = 'input window, operand 2, single buffered']
    #allocation6 [shape = 's32[1]{0}', space=sflag, size = 0x4, scoped, tag = 'scoped memory for tpu_custom_call.1']
    #allocation7 [shape = 'u8[4096]{0}', space=vmem, size = 0x1000, scoped, tag = 'output window, operand 0, single buffered']
    %8 = vsyncpa [#allocation3], 0
    %9 = vsyncpa [#allocation6], 0
    %10 = vsyncpa [#allocation4], 0
    // Predicated region
    $region2: #{tpu_custom_call.1} parent=1 // pred_check
      _
    $region3: #{tpu_custom_call.1} parent=1 // pred_check_branch
      %12 = sbr.rel (0) target = $region5
    $region4: #{tpu_custom_call.1} parent=1 // pred_region
      %s14 = ssub.s32 16, 16
      %15 = vsyncadd [#allocation3], %s14
      %s17 = sshll.u32 [#allocation2], 4
      %s18 = int_to_ptr.vmem [resolvable:$true] %s17
      %20 = dma.hbm_to_vmem [thread:$0]  %s0, 16, %s18, [#allocation3]
    $region5: #{tpu_custom_call.1} parent=1 // pred_fallthru
      _
    // Predicated region
    $region6: #{tpu_custom_call.1} parent=1 // pred_check
      _
    $region7: #{tpu_custom_call.1} parent=1 // pred_check_branch
      %22 = sbr.rel (0) target = $region9
    $region8: #{tpu_custom_call.1} parent=1 // pred_region
      _
    $region9: #{tpu_custom_call.1} parent=1 // pred_fallthru
      _
    // Predicated region
    $region10: #{tpu_custom_call.1} parent=1 // pred_check
      _
    $region11: #{tpu_custom_call.1} parent=1 // pred_check_branch
      %24 = sbr.rel (0) target = $region13
    $region12: #{tpu_custom_call.1} parent=1 // pred_region
      %s26 = ssub.s32 128, 64
      %27 = vsyncadd [#allocation6], %s26
      %s28 = sshll.u32 [#allocation5], 4
      %s29 = int_to_ptr.vmem [resolvable:$true] %s28
      %34 = dma.hbm_to_vmem [thread:$0]  %s2, 64, %s29, [#allocation6], 64, 64, 4
    $region13: #{tpu_custom_call.1} parent=1 // pred_fallthru
      _
    // Predicated region
    $region14: #{tpu_custom_call.1} parent=1 // pred_check
      _
    $region15: #{tpu_custom_call.1} parent=1 // pred_check_branch
      %36 = sbr.rel (0) target = $region17
    $region16: #{tpu_custom_call.1} parent=1 // pred_region
      %37 = dma.done [#allocation3], 16
    $region17: #{tpu_custom_call.1} parent=1 // pred_fallthru
      _
    // Predicated region
    $region18: #{tpu_custom_call.1} parent=1 // pred_check
      _
    $region19: #{tpu_custom_call.1} parent=1 // pred_check_branch
      %39 = sbr.rel (0) target = $region21
    $region20: #{tpu_custom_call.1} parent=1 // pred_region
      %40 = dma.done [#allocation6], 128
    $region21: #{tpu_custom_call.1} parent=1 // pred_fallthru
      _
    %v41 = vld [vmem:[#allocation5] sm:$0xff]
    %v42 = vld [vmem:[#allocation2] sm:$0x1]
    %v44 = vlaneseq
    %v45 = vshrl.u32 %v44, 7
    %v46 = vsub.s32 0, %v45
    %v47 = vrot.slane %v42, %v46
    %v49 = vsub.f32 %v41, %v47
    %v50 = vld [vmem:[%s1] sm:$0x1]
    %v52 = vlaneseq
    %v53 = vshrl.u32 %v52, 7
    %v54 = vsub.s32 0, %v53
    %v55 = vrot.slane %v50, %v54
    %v57 = vmul.f32 %v49, %v55
    %58 = vst [vmem:[#allocation7] sm:$0xff] %v57
    // Predicated region
    $region22: #{tpu_custom_call.1} parent=1 // pred_check
      _
    $region23: #{tpu_custom_call.1} parent=1 // pred_check_branch
      %60 = sbr.rel (0) target = $region25
    $region24: #{tpu_custom_call.1} parent=1 // pred_region
      %s62 = ssub.s32 128, 64
      %63 = vsyncadd [#allocation4], %s62
      %s64 = sshll.u32 [#allocation7], 4
      %s65 = int_to_ptr.vmem [resolvable:$true] %s64
      %70 = dma.vmem_to_hbm [thread:$0]  %s65, 64, %s3, [#allocation4], 64, 64, 4
    $region25: #{tpu_custom_call.1} parent=1 // pred_fallthru
      _
    // Predicated region
    $region26: #{tpu_custom_call.1} parent=1 // pred_check
      _
    $region27: #{tpu_custom_call.1} parent=1 // pred_check_branch
      %72 = sbr.rel (0) target = $region29
    $region28: #{tpu_custom_call.1} parent=1 // pred_region
      %73 = dma.done [#allocation4], 128
    $region29: #{tpu_custom_call.1} parent=1 // pred_fallthru
      _
    %74 = vsyncpa [#allocation3], 1
    %75 = vsyncpa [#allocation6], 1
    %76 = vsyncpa [#allocation4], 1

</llo_original>
